<compile_context>
chip_gen: v7x
topology: tpu7x:2x2x1
jax: 0.10.0
libtpu: 0.0.40
codegen_flags: <defaults>
</compile_context>

<pallas_src>
import jax
import jax.numpy as jnp
from jax import lax
from jax.experimental import pallas as pl
from jax.experimental.pallas import tpu as pltpu

F_PAD = 8  # sublane padding for the feature axes (in_features / out_features <= 8)


def mlp_kernel(xt_ref, w1_ref, w2_ref, o_ref):
    # xt_ref: (F_PAD, Np)      VMEM f32 -- x^T; rows 0..in_f-1 real, rest zero
    # w1_ref: (in_f+1, hid)    SMEM f32 -- last row = b1
    # w2_ref: (hid+1, out_f)   SMEM f32 -- last row = b2
    # o_ref : (F_PAD, Np)      VMEM f32 -- softmax(logits)^T in rows 0..out_f-1
    in_f = w1_ref.shape[0] - 1
    hid = w1_ref.shape[1]
    out_f = w2_ref.shape[1]

    # ---- fc1 + ReLU: scalar-from-SMEM broadcast FMAs on (1, Np) lane vectors
    x_rows = [xt_ref[k:k + 1, :] for k in range(in_f)]
    h_rows = []
    for j in range(hid):                       # static unroll, hid = 4
        acc = x_rows[0] * w1_ref[0, j]
        for k in range(1, in_f):               # static unroll, in_f = 3
            acc = acc + x_rows[k] * w1_ref[k, j]
        acc = acc + w1_ref[in_f, j]            # bias (folded row)
        h_rows.append(jnp.maximum(acc, 0.0))   # ReLU

    # ---- fc2: same scalar-broadcast FMA pattern
    l_rows = []
    for j in range(out_f):                     # static unroll, out_f = 3
        acc = h_rows[0] * w2_ref[0, j]
        for k in range(1, hid):
            acc = acc + h_rows[k] * w2_ref[k, j]
        l_rows.append(acc + w2_ref[hid, j])    # bias (folded row)

    # ---- numerically stable softmax over the out_f rows
    #      (pure elementwise lane ops across 3 single-vreg rows; no XLU needed)
    m = l_rows[0]
    for j in range(1, out_f):
        m = jnp.maximum(m, l_rows[j])
    e_rows = [jnp.exp(l - m) for l in l_rows]
    denom = e_rows[0]
    for j in range(1, out_f):
        denom = denom + e_rows[j]
    inv = pl.reciprocal(denom, approx=True)    # EUP vrcp (separate bundle slot)
    inv = inv * (2.0 - denom * inv)            # one Newton step -> ~1e-7 rel err

    # ---- assemble one lane/sublane-dense tile, single unmasked full-tile store
    row_id = lax.broadcasted_iota(jnp.int32, o_ref.shape, 0)
    out = jnp.zeros(o_ref.shape, jnp.float32)
    for j in range(out_f):
        out = jnp.where(row_id == j, e_rows[j] * inv, out)
    o_ref[...] = out


def pack_params(w1, b1, w2, b2):
    """Fold biases into an extra weight row.  Runs ONCE (hoisted out of forward)."""
    w1a = jnp.concatenate([w1, b1.reshape(1, -1)], axis=0).astype(jnp.float32)
    w2a = jnp.concatenate([w2, b2.reshape(1, -1)], axis=0).astype(jnp.float32)
    return w1a, w2a


@jax.jit
def simple_model_forward(x, w1a, w2a):
    n, in_f = x.shape
    out_f = w2a.shape[1]
    assert w1a.shape[0] == in_f + 1 and in_f <= F_PAD and out_f <= F_PAD

    n_pad = ((n + 127) // 128) * 128           # lane-dense sample axis
    # One fused pad: x^T with features padded to 8 sublanes, samples to n_pad lanes.
    xt = jnp.pad(x.astype(jnp.float32).T, ((0, F_PAD - in_f), (0, n_pad - n)))

    out_t = pl.pallas_call(
        mlp_kernel,
        out_shape=jax.ShapeDtypeStruct((F_PAD, n_pad), jnp.float32),
        in_specs=[
            pl.BlockSpec((F_PAD, n_pad), lambda: (0, 0), memory_space=pltpu.VMEM),
            pl.BlockSpec(memory_space=pltpu.SMEM),   # w1 + b1, scalar reads
            pl.BlockSpec(memory_space=pltpu.SMEM),   # w2 + b2, scalar reads
        ],
        out_specs=pl.BlockSpec(
            (F_PAD, n_pad), lambda: (0, 0), memory_space=pltpu.VMEM
        ),
    )(xt, w1a, w2a)

    # Transpose/slice back to (n, out_f); fused into the same jit.
    return out_t[:out_f, :n].T


def init_linear_params(key, in_features, out_features):
    # Deterministic init mimicking nn.Linear: U(-1/sqrt(fan_in), 1/sqrt(fan_in)).
    kw, kb = jax.random.split(key)
    bound = 1.0 / jnp.sqrt(jnp.float32(in_features))
    w = jax.random.uniform(kw, (in_features, out_features), jnp.float32, -bound, bound)
    b = jax.random.uniform(kb, (1, out_features), jnp.float32, -bound, bound)
    return w, b


if __name__ == "__main__":
    input_size = 3
    hidden_size = 4
    output_size = 3
    n = 100  # matches x = torch.randn(100, input_size)

    key = jax.random.PRNGKey(0)
    kx, k1, k2 = jax.random.split(key, 3)

    x = jax.random.normal(kx, (n, input_size), jnp.float32)
    w1, b1 = init_linear_params(k1, input_size, hidden_size)
    w2, b2 = init_linear_params(k2, hidden_size, output_size)

    # Constant weight prep hoisted out of the per-call path.
    w1a, w2a = pack_params(w1, b1, w2, b2)

    out = simple_model_forward(x, w1a, w2a)
    out = jax.block_until_ready(out)

    # Sanity check against a pure-JAX reference of the same forward pass.
    h_ref = jnp.maximum(x @ w1 + b1, 0.0)
    ref = jax.nn.softmax(h_ref @ w2 + b2, axis=1)
    assert out.shape == (n, output_size)
    assert jnp.allclose(out, ref, atol=1e-5, rtol=1e-5)
    # Softmax rows sum to 1.
    assert jnp.allclose(jnp.sum(out, axis=1), jnp.ones((n,)), atol=1e-5)

    print("KERNEL_OK")
</pallas_src>

<mosaic_0001>
module attributes {stable_mosaic.version = 11 : i64} {
  func.func @mlp_kernel(%arg0: memref<8x128xf32, #tpu.memory_space<vmem>>, %arg1: memref<4x4xf32, #tpu.memory_space<smem>>, %arg2: memref<5x3xf32, #tpu.memory_space<smem>>, %arg3: memref<8x128xf32, #tpu.memory_space<vmem>>) attributes {dimension_semantics = [], scalar_prefetch = 0 : i64, scratch_operands = 0 : i64, tpu.core_type = #tpu.core_type<tc>} {
    %c0 = arith.constant 0 : index
    %c0_0 = arith.constant 0 : index
    %0 = vector.load %arg0[%c0, %c0_0] : memref<8x128xf32, #tpu.memory_space<vmem>>, vector<1x128xf32>
    %c1 = arith.constant 1 : index
    %c0_1 = arith.constant 0 : index
    %1 = vector.load %arg0[%c1, %c0_1] : memref<8x128xf32, #tpu.memory_space<vmem>>, vector<1x128xf32>
    %c2 = arith.constant 2 : index
    %c0_2 = arith.constant 0 : index
    %2 = vector.load %arg0[%c2, %c0_2] : memref<8x128xf32, #tpu.memory_space<vmem>>, vector<1x128xf32>
    %c0_3 = arith.constant 0 : index
    %c0_4 = arith.constant 0 : index
    %3 = memref.load %arg1[%c0_3, %c0_4] : memref<4x4xf32, #tpu.memory_space<smem>>
    %4 = vector.broadcast %3 : f32 to vector<1x128xf32>
    %5 = arith.mulf %0, %4 : vector<1x128xf32>
    %c1_5 = arith.constant 1 : index
    %c0_6 = arith.constant 0 : index
    %6 = memref.load %arg1[%c1_5, %c0_6] : memref<4x4xf32, #tpu.memory_space<smem>>
    %7 = vector.broadcast %6 : f32 to vector<1x128xf32>
    %8 = arith.mulf %1, %7 : vector<1x128xf32>
    %9 = arith.addf %5, %8 : vector<1x128xf32>
    %c2_7 = arith.constant 2 : index
    %c0_8 = arith.constant 0 : index
    %10 = memref.load %arg1[%c2_7, %c0_8] : memref<4x4xf32, #tpu.memory_space<smem>>
    %11 = vector.broadcast %10 : f32 to vector<1x128xf32>
    %12 = arith.mulf %2, %11 : vector<1x128xf32>
    %13 = arith.addf %9, %12 : vector<1x128xf32>
    %c3 = arith.constant 3 : index
    %c0_9 = arith.constant 0 : index
    %14 = memref.load %arg1[%c3, %c0_9] : memref<4x4xf32, #tpu.memory_space<smem>>
    %15 = vector.broadcast %14 : f32 to vector<1x128xf32>
    %16 = arith.addf %13, %15 : vector<1x128xf32>
    %cst = arith.constant 0.000000e+00 : f32
    %17 = vector.broadcast %cst : f32 to vector<1x128xf32>
    %18 = arith.maximumf %16, %17 : vector<1x128xf32>
    %c0_10 = arith.constant 0 : index
    %c1_11 = arith.constant 1 : index
    %19 = memref.load %arg1[%c0_10, %c1_11] : memref<4x4xf32, #tpu.memory_space<smem>>
    %20 = vector.broadcast %19 : f32 to vector<1x128xf32>
    %21 = arith.mulf %0, %20 : vector<1x128xf32>
    %c1_12 = arith.constant 1 : index
    %c1_13 = arith.constant 1 : index
    %22 = memref.load %arg1[%c1_12, %c1_13] : memref<4x4xf32, #tpu.memory_space<smem>>
    %23 = vector.broadcast %22 : f32 to vector<1x128xf32>
    %24 = arith.mulf %1, %23 : vector<1x128xf32>
    %25 = arith.addf %21, %24 : vector<1x128xf32>
    %c2_14 = arith.constant 2 : index
    %c1_15 = arith.constant 1 : index
    %26 = memref.load %arg1[%c2_14, %c1_15] : memref<4x4xf32, #tpu.memory_space<smem>>
    %27 = vector.broadcast %26 : f32 to vector<1x128xf32>
    %28 = arith.mulf %2, %27 : vector<1x128xf32>
    %29 = arith.addf %25, %28 : vector<1x128xf32>
    %c3_16 = arith.constant 3 : index
    %c1_17 = arith.constant 1 : index
    %30 = memref.load %arg1[%c3_16, %c1_17] : memref<4x4xf32, #tpu.memory_space<smem>>
    %31 = vector.broadcast %30 : f32 to vector<1x128xf32>
    %32 = arith.addf %29, %31 : vector<1x128xf32>
    %cst_18 = arith.constant 0.000000e+00 : f32
    %33 = vector.broadcast %cst_18 : f32 to vector<1x128xf32>
    %34 = arith.maximumf %32, %33 : vector<1x128xf32>
    %c0_19 = arith.constant 0 : index
    %c2_20 = arith.constant 2 : index
    %35 = memref.load %arg1[%c0_19, %c2_20] : memref<4x4xf32, #tpu.memory_space<smem>>
    %36 = vector.broadcast %35 : f32 to vector<1x128xf32>
    %37 = arith.mulf %0, %36 : vector<1x128xf32>
    %c1_21 = arith.constant 1 : index
    %c2_22 = arith.constant 2 : index
    %38 = memref.load %arg1[%c1_21, %c2_22] : memref<4x4xf32, #tpu.memory_space<smem>>
    %39 = vector.broadcast %38 : f32 to vector<1x128xf32>
    %40 = arith.mulf %1, %39 : vector<1x128xf32>
    %41 = arith.addf %37, %40 : vector<1x128xf32>
    %c2_23 = arith.constant 2 : index
    %c2_24 = arith.constant 2 : index
    %42 = memref.load %arg1[%c2_23, %c2_24] : memref<4x4xf32, #tpu.memory_space<smem>>
    %43 = vector.broadcast %42 : f32 to vector<1x128xf32>
    %44 = arith.mulf %2, %43 : vector<1x128xf32>
    %45 = arith.addf %41, %44 : vector<1x128xf32>
    %c3_25 = arith.constant 3 : index
    %c2_26 = arith.constant 2 : index
    %46 = memref.load %arg1[%c3_25, %c2_26] : memref<4x4xf32, #tpu.memory_space<smem>>
    %47 = vector.broadcast %46 : f32 to vector<1x128xf32>
    %48 = arith.addf %45, %47 : vector<1x128xf32>
    %cst_27 = arith.constant 0.000000e+00 : f32
    %49 = vector.broadcast %cst_27 : f32 to vector<1x128xf32>
    %50 = arith.maximumf %48, %49 : vector<1x128xf32>
    %c0_28 = arith.constant 0 : index
    %c3_29 = arith.constant 3 : index
    %51 = memref.load %arg1[%c0_28, %c3_29] : memref<4x4xf32, #tpu.memory_space<smem>>
    %52 = vector.broadcast %51 : f32 to vector<1x128xf32>
    %53 = arith.mulf %0, %52 : vector<1x128xf32>
    %c1_30 = arith.constant 1 : index
    %c3_31 = arith.constant 3 : index
    %54 = memref.load %arg1[%c1_30, %c3_31] : memref<4x4xf32, #tpu.memory_space<smem>>
    %55 = vector.broadcast %54 : f32 to vector<1x128xf32>
    %56 = arith.mulf %1, %55 : vector<1x128xf32>
    %57 = arith.addf %53, %56 : vector<1x128xf32>
    %c2_32 = arith.constant 2 : index
    %c3_33 = arith.constant 3 : index
    %58 = memref.load %arg1[%c2_32, %c3_33] : memref<4x4xf32, #tpu.memory_space<smem>>
    %59 = vector.broadcast %58 : f32 to vector<1x128xf32>
    %60 = arith.mulf %2, %59 : vector<1x128xf32>
    %61 = arith.addf %57, %60 : vector<1x128xf32>
    %c3_34 = arith.constant 3 : index
    %c3_35 = arith.constant 3 : index
    %62 = memref.load %arg1[%c3_34, %c3_35] : memref<4x4xf32, #tpu.memory_space<smem>>
    %63 = vector.broadcast %62 : f32 to vector<1x128xf32>
    %64 = arith.addf %61, %63 : vector<1x128xf32>
    %cst_36 = arith.constant 0.000000e+00 : f32
    %65 = vector.broadcast %cst_36 : f32 to vector<1x128xf32>
    %66 = arith.maximumf %64, %65 : vector<1x128xf32>
    %c0_37 = arith.constant 0 : index
    %c0_38 = arith.constant 0 : index
    %67 = memref.load %arg2[%c0_37, %c0_38] : memref<5x3xf32, #tpu.memory_space<smem>>
    %68 = vector.broadcast %67 : f32 to vector<1x128xf32>
    %69 = arith.mulf %18, %68 : vector<1x128xf32>
    %c1_39 = arith.constant 1 : index
    %c0_40 = arith.constant 0 : index
    %70 = memref.load %arg2[%c1_39, %c0_40] : memref<5x3xf32, #tpu.memory_space<smem>>
    %71 = vector.broadcast %70 : f32 to vector<1x128xf32>
    %72 = arith.mulf %34, %71 : vector<1x128xf32>
    %73 = arith.addf %69, %72 : vector<1x128xf32>
    %c2_41 = arith.constant 2 : index
    %c0_42 = arith.constant 0 : index
    %74 = memref.load %arg2[%c2_41, %c0_42] : memref<5x3xf32, #tpu.memory_space<smem>>
    %75 = vector.broadcast %74 : f32 to vector<1x128xf32>
    %76 = arith.mulf %50, %75 : vector<1x128xf32>
    %77 = arith.addf %73, %76 : vector<1x128xf32>
    %c3_43 = arith.constant 3 : index
    %c0_44 = arith.constant 0 : index
    %78 = memref.load %arg2[%c3_43, %c0_44] : memref<5x3xf32, #tpu.memory_space<smem>>
    %79 = vector.broadcast %78 : f32 to vector<1x128xf32>
    %80 = arith.mulf %66, %79 : vector<1x128xf32>
    %81 = arith.addf %77, %80 : vector<1x128xf32>
    %c4 = arith.constant 4 : index
    %c0_45 = arith.constant 0 : index
    %82 = memref.load %arg2[%c4, %c0_45] : memref<5x3xf32, #tpu.memory_space<smem>>
    %83 = vector.broadcast %82 : f32 to vector<1x128xf32>
    %84 = arith.addf %81, %83 : vector<1x128xf32>
    %c0_46 = arith.constant 0 : index
    %c1_47 = arith.constant 1 : index
    %85 = memref.load %arg2[%c0_46, %c1_47] : memref<5x3xf32, #tpu.memory_space<smem>>
    %86 = vector.broadcast %85 : f32 to vector<1x128xf32>
    %87 = arith.mulf %18, %86 : vector<1x128xf32>
    %c1_48 = arith.constant 1 : index
    %c1_49 = arith.constant 1 : index
    %88 = memref.load %arg2[%c1_48, %c1_49] : memref<5x3xf32, #tpu.memory_space<smem>>
    %89 = vector.broadcast %88 : f32 to vector<1x128xf32>
    %90 = arith.mulf %34, %89 : vector<1x128xf32>
    %91 = arith.addf %87, %90 : vector<1x128xf32>
    %c2_50 = arith.constant 2 : index
    %c1_51 = arith.constant 1 : index
    %92 = memref.load %arg2[%c2_50, %c1_51] : memref<5x3xf32, #tpu.memory_space<smem>>
    %93 = vector.broadcast %92 : f32 to vector<1x128xf32>
    %94 = arith.mulf %50, %93 : vector<1x128xf32>
    %95 = arith.addf %91, %94 : vector<1x128xf32>
    %c3_52 = arith.constant 3 : index
    %c1_53 = arith.constant 1 : index
    %96 = memref.load %arg2[%c3_52, %c1_53] : memref<5x3xf32, #tpu.memory_space<smem>>
    %97 = vector.broadcast %96 : f32 to vector<1x128xf32>
    %98 = arith.mulf %66, %97 : vector<1x128xf32>
    %99 = arith.addf %95, %98 : vector<1x128xf32>
    %c4_54 = arith.constant 4 : index
    %c1_55 = arith.constant 1 : index
    %100 = memref.load %arg2[%c4_54, %c1_55] : memref<5x3xf32, #tpu.memory_space<smem>>
    %101 = vector.broadcast %100 : f32 to vector<1x128xf32>
    %102 = arith.addf %99, %101 : vector<1x128xf32>
    %c0_56 = arith.constant 0 : index
    %c2_57 = arith.constant 2 : index
    %103 = memref.load %arg2[%c0_56, %c2_57] : memref<5x3xf32, #tpu.memory_space<smem>>
    %104 = vector.broadcast %103 : f32 to vector<1x128xf32>
    %105 = arith.mulf %18, %104 : vector<1x128xf32>
    %c1_58 = arith.constant 1 : index
    %c2_59 = arith.constant 2 : index
    %106 = memref.load %arg2[%c1_58, %c2_59] : memref<5x3xf32, #tpu.memory_space<smem>>
    %107 = vector.broadcast %106 : f32 to vector<1x128xf32>
    %108 = arith.mulf %34, %107 : vector<1x128xf32>
    %109 = arith.addf %105, %108 : vector<1x128xf32>
    %c2_60 = arith.constant 2 : index
    %c2_61 = arith.constant 2 : index
    %110 = memref.load %arg2[%c2_60, %c2_61] : memref<5x3xf32, #tpu.memory_space<smem>>
    %111 = vector.broadcast %110 : f32 to vector<1x128xf32>
    %112 = arith.mulf %50, %111 : vector<1x128xf32>
    %113 = arith.addf %109, %112 : vector<1x128xf32>
    %c3_62 = arith.constant 3 : index
    %c2_63 = arith.constant 2 : index
    %114 = memref.load %arg2[%c3_62, %c2_63] : memref<5x3xf32, #tpu.memory_space<smem>>
    %115 = vector.broadcast %114 : f32 to vector<1x128xf32>
    %116 = arith.mulf %66, %115 : vector<1x128xf32>
    %117 = arith.addf %113, %116 : vector<1x128xf32>
    %c4_64 = arith.constant 4 : index
    %c2_65 = arith.constant 2 : index
    %118 = memref.load %arg2[%c4_64, %c2_65] : memref<5x3xf32, #tpu.memory_space<smem>>
    %119 = vector.broadcast %118 : f32 to vector<1x128xf32>
    %120 = arith.addf %117, %119 : vector<1x128xf32>
    %121 = arith.maximumf %84, %102 : vector<1x128xf32>
    %122 = arith.maximumf %121, %120 : vector<1x128xf32>
    %123 = arith.subf %84, %122 : vector<1x128xf32>
    %124 = math.exp %123 : vector<1x128xf32>
    %125 = arith.subf %102, %122 : vector<1x128xf32>
    %126 = math.exp %125 : vector<1x128xf32>
    %127 = arith.subf %120, %122 : vector<1x128xf32>
    %128 = math.exp %127 : vector<1x128xf32>
    %129 = arith.addf %124, %126 : vector<1x128xf32>
    %130 = arith.addf %129, %128 : vector<1x128xf32>
    %131 = tpu.reciprocal %130 {approx = true} : vector<1x128xf32> -> vector<1x128xf32>
    %132 = arith.mulf %130, %131 : vector<1x128xf32>
    %cst_66 = arith.constant 2.000000e+00 : f32
    %133 = vector.broadcast %cst_66 : f32 to vector<1x128xf32>
    %134 = arith.subf %133, %132 : vector<1x128xf32>
    %135 = arith.mulf %131, %134 : vector<1x128xf32>
    %136 = tpu.iota {dimensions = array<i32: 0>} : vector<8x128xi32>
    %cst_67 = arith.constant 0.000000e+00 : f32
    %137 = vector.broadcast %cst_67 : f32 to vector<8x128xf32>
    %c0_i32 = arith.constant 0 : i32
    %138 = vector.broadcast %c0_i32 : i32 to vector<8x128xi32>
    %139 = arith.cmpi eq, %136, %138 : vector<8x128xi32>
    %140 = arith.mulf %124, %135 : vector<1x128xf32>
    %141 = vector.shape_cast %140 : vector<1x128xf32> to vector<1x128xf32>
    %142 = vector.broadcast %141 : vector<1x128xf32> to vector<8x128xf32>
    %143 = arith.select %139, %142, %137 : vector<8x128xi1>, vector<8x128xf32>
    %c1_i32 = arith.constant 1 : i32
    %144 = vector.broadcast %c1_i32 : i32 to vector<8x128xi32>
    %145 = arith.cmpi eq, %136, %144 : vector<8x128xi32>
    %146 = arith.mulf %126, %135 : vector<1x128xf32>
    %147 = vector.shape_cast %146 : vector<1x128xf32> to vector<1x128xf32>
    %148 = vector.broadcast %147 : vector<1x128xf32> to vector<8x128xf32>
    %149 = arith.select %145, %148, %143 : vector<8x128xi1>, vector<8x128xf32>
    %c2_i32 = arith.constant 2 : i32
    %150 = vector.broadcast %c2_i32 : i32 to vector<8x128xi32>
    %151 = arith.cmpi eq, %136, %150 : vector<8x128xi32>
    %152 = arith.mulf %128, %135 : vector<1x128xf32>
    %153 = vector.shape_cast %152 : vector<1x128xf32> to vector<1x128xf32>
    %154 = vector.broadcast %153 : vector<1x128xf32> to vector<8x128xf32>
    %155 = arith.select %151, %154, %149 : vector<8x128xi1>, vector<8x128xf32>
    %c0_68 = arith.constant 0 : index
    %c0_69 = arith.constant 0 : index
    %156 = vector.load %arg3[%c0_68, %c0_69] : memref<8x128xf32, #tpu.memory_space<vmem>>, vector<8x128xf32>
    tpu.vector_store %arg3[%c0_68, %c0_69], %155 {strides = array<i32>} : memref<8x128xf32, #tpu.memory_space<vmem>>, vector<8x128xf32>,
    return
  }
}

</mosaic_0001>

<llo_original>
// kernel: simple_model_forward.1
$region0: #{simple_model_forward.1}
  #allocation0 [shape = 'u32[]', space=smem, size = 0x4, offset = 0x4, fixed_abs, tag = 'smem constant byte address 0x4 - core index']
  #allocation1 [shape = 'u32[144,128]{1,0:T(1,128)}', space=vmem, size = 0x12000, scoped, tag = 'internal scratch']
  %s0 = inlined_call_operand.vmem [shape: f32[8,128], index: 0, kind: input, shape index: {}]
  %s1 = inlined_call_operand.vmem [shape: f32[4,4], index: 1, kind: input, shape index: {}]
  %s2 = inlined_call_operand.vmem [shape: f32[5,3], index: 2, kind: input, shape index: {}]
  %s3 = inlined_call_operand.vmem [shape: f32[8,128], index: 3, kind: output, shape index: {}]
  %s4 = sld [smem:[#allocation0]]
  $region30: #{simple_model_forward.1} parent=0
    _
  %s6 = ssub.s32 1, %s4
  %s7 = scalar_select 0, %s6, %s4
  $region1: #{simple_model_forward.1} parent=0
    #allocation2 [shape = 'u8[2048]{0}', space=smem, size = 0x800, scoped, tag = 'input window, operand 1, single buffered']
    #allocation3 [shape = 's32[1]{0}', space=sflag, size = 0x4, scoped, tag = 'scoped memory for simple_model_forward.1']
    #allocation4 [shape = 'u8[4096]{0}', space=smem, size = 0x1000, scoped, tag = 'input window, operand 2, single buffered']
    #allocation5 [shape = 's32[1]{0}', space=sflag, size = 0x4, scoped, tag = 'scoped memory for simple_model_forward.1']
    %8 = vsyncpa [#allocation3], 0
    %9 = vsyncpa [#allocation5], 0
    // Predicated region
    $region2: #{simple_model_forward.1} parent=1 // pred_check
      _
    $region3: #{simple_model_forward.1} parent=1 // pred_check_branch
      %11 = sbr.rel (0) target = $region5
    $region4: #{simple_model_forward.1} parent=1 // pred_region
      _
    $region5: #{simple_model_forward.1} parent=1 // pred_fallthru
      _
    // Predicated region
    $region6: #{simple_model_forward.1} parent=1 // pred_check
      _
    $region7: #{simple_model_forward.1} parent=1 // pred_check_branch
      %13 = sbr.rel (0) target = $region9
    $region8: #{simple_model_forward.1} parent=1 // pred_region
      %s15 = ssub.s32 64, 64
      %16 = vsyncadd [#allocation3], %s15
      %s18 = sshll.u32 %s1, 4
      %s19 = int_to_ptr.vmem [resolvable:$true] %s18
      %21 = dma.vmem_to_smem %s19, 64, [#allocation2], [#allocation3]
    $region9: #{simple_model_forward.1} parent=1 // pred_fallthru
      _
    // Predicated region
    $region10: #{simple_model_forward.1} parent=1 // pred_check
      _
    $region11: #{simple_model_forward.1} parent=1 // pred_check_branch
      %23 = sbr.rel (0) target = $region13
    $region12: #{simple_model_forward.1} parent=1 // pred_region
      %s25 = ssub.s32 128, 128
      %26 = vsyncadd [#allocation5], %s25
      %s28 = sshll.u32 %s2, 4
      %s29 = int_to_ptr.vmem [resolvable:$true] %s28
      %31 = dma.vmem_to_smem %s29, 128, [#allocation4], [#allocation5]
    $region13: #{simple_model_forward.1} parent=1 // pred_fallthru
      _
    // Predicated region
    $region14: #{simple_model_forward.1} parent=1 // pred_check
      _
    $region15: #{simple_model_forward.1} parent=1 // pred_check_branch
      %33 = sbr.rel (0) target = $region17
    $region16: #{simple_model_forward.1} parent=1 // pred_region
      %34 = dma.done [#allocation3], 64
    $region17: #{simple_model_forward.1} parent=1 // pred_fallthru
      _
    // Predicated region
    $region18: #{simple_model_forward.1} parent=1 // pred_check
      _
    $region19: #{simple_model_forward.1} parent=1 // pred_check_branch
      %36 = sbr.rel (0) target = $region21
    $region20: #{simple_model_forward.1} parent=1 // pred_region
      %37 = dma.done [#allocation5], 128
    $region21: #{simple_model_forward.1} parent=1 // pred_fallthru
      _
    %38 = sfence
    %v39 = vld [vmem:[%s0] sm:$0x1]
    %v40 = vld [vmem:[%s0 + $0x1] sm:$0x1]
    %v41 = vld [vmem:[%s0 + $0x2] sm:$0x1]
    %s42 = sld [smem:[#allocation2]]
    %v43 = vstv %s42
    %v44 = vmul.f32 %v39, %v43
    %s45 = sld [smem:[#allocation2 + $0x80]]
    %v46 = vstv %s45
    %v47 = vmul.f32 %v40, %v46
    %v48 = vadd.f32 %v44, %v47
    %s49 = sld [smem:[#allocation2 + $0x100]]
    %v50 = vstv %s49
    %v51 = vmul.f32 %v41, %v50
    %v52 = vadd.f32 %v48, %v51
    %s53 = sld [smem:[#allocation2 + $0x180]]
    %v54 = vstv %s53
    %v55 = vadd.f32 %v52, %v54
    %v56 = vmax.f32 %v55, 0.0
    %s57 = sld [smem:[#allocation2 + $0x1]]
    %v58 = vstv %s57
    %v59 = vmul.f32 %v39, %v58
    %s60 = sld [smem:[#allocation2 + $0x81]]
    %v61 = vstv %s60
    %v62 = vmul.f32 %v40, %v61
    %v63 = vadd.f32 %v59, %v62
    %s64 = sld [smem:[#allocation2 + $0x101]]
    %v65 = vstv %s64
    %v66 = vmul.f32 %v41, %v65
    %v67 = vadd.f32 %v63, %v66
    %s68 = sld [smem:[#allocation2 + $0x181]]
    %v69 = vstv %s68
    %v70 = vadd.f32 %v67, %v69
    %v71 = vmax.f32 %v70, 0.0
    %s72 = sld [smem:[#allocation2 + $0x2]]
    %v73 = vstv %s72
    %v74 = vmul.f32 %v39, %v73
    %s75 = sld [smem:[#allocation2 + $0x82]]
    %v76 = vstv %s75
    %v77 = vmul.f32 %v40, %v76
    %v78 = vadd.f32 %v74, %v77
    %s79 = sld [smem:[#allocation2 + $0x102]]
    %v80 = vstv %s79
    %v81 = vmul.f32 %v41, %v80
    %v82 = vadd.f32 %v78, %v81
    %s83 = sld [smem:[#allocation2 + $0x182]]
    %v84 = vstv %s83
    %v85 = vadd.f32 %v82, %v84
    %v86 = vmax.f32 %v85, 0.0
    %s87 = sld [smem:[#allocation2 + $0x3]]
    %v88 = vstv %s87
    %v89 = vmul.f32 %v39, %v88
    %s90 = sld [smem:[#allocation2 + $0x83]]
    %v91 = vstv %s90
    %v92 = vmul.f32 %v40, %v91
    %v93 = vadd.f32 %v89, %v92
    %s94 = sld [smem:[#allocation2 + $0x103]]
    %v95 = vstv %s94
    %v96 = vmul.f32 %v41, %v95
    %v97 = vadd.f32 %v93, %v96
    %s98 = sld [smem:[#allocation2 + $0x183]]
    %v99 = vstv %s98
    %v100 = vadd.f32 %v97, %v99
    %v101 = vmax.f32 %v100, 0.0
    %s102 = sld [smem:[#allocation4]]
    %v103 = vstv %s102
    %v104 = vmul.f32 %v56, %v103
    %s105 = sld [smem:[#allocation4 + $0x80]]
    %v106 = vstv %s105
    %v107 = vmul.f32 %v71, %v106
    %v108 = vadd.f32 %v104, %v107
    %s109 = sld [smem:[#allocation4 + $0x100]]
    %v110 = vstv %s109
    %v111 = vmul.f32 %v86, %v110
    %v112 = vadd.f32 %v108, %v111
    %s113 = sld [smem:[#allocation4 + $0x180]]
    %v114 = vstv %s113
    %v115 = vmul.f32 %v101, %v114
    %v116 = vadd.f32 %v112, %v115
    %s117 = sld [smem:[#allocation4 + $0x200]]
    %v118 = vstv %s117
    %v119 = vadd.f32 %v116, %v118
    %s120 = sld [smem:[#allocation4 + $0x1]]
    %v121 = vstv %s120
    %v122 = vmul.f32 %v56, %v121
    %s123 = sld [smem:[#allocation4 + $0x81]]
    %v124 = vstv %s123
    %v125 = vmul.f32 %v71, %v124
    %v126 = vadd.f32 %v122, %v125
    %s127 = sld [smem:[#allocation4 + $0x101]]
    %v128 = vstv %s127
    %v129 = vmul.f32 %v86, %v128
    %v130 = vadd.f32 %v126, %v129
    %s131 = sld [smem:[#allocation4 + $0x181]]
    %v132 = vstv %s131
    %v133 = vmul.f32 %v101, %v132
    %v134 = vadd.f32 %v130, %v133
    %s135 = sld [smem:[#allocation4 + $0x201]]
    %v136 = vstv %s135
    %v137 = vadd.f32 %v134, %v136
    %s138 = sld [smem:[#allocation4 + $0x2]]
    %v139 = vstv %s138
    %v140 = vmul.f32 %v56, %v139
    %s141 = sld [smem:[#allocation4 + $0x82]]
    %v142 = vstv %s141
    %v143 = vmul.f32 %v71, %v142
    %v144 = vadd.f32 %v140, %v143
    %s145 = sld [smem:[#allocation4 + $0x102]]
    %v146 = vstv %s145
    %v147 = vmul.f32 %v86, %v146
    %v148 = vadd.f32 %v144, %v147
    %s149 = sld [smem:[#allocation4 + $0x182]]
    %v150 = vstv %s149
    %v151 = vmul.f32 %v101, %v150
    %v152 = vadd.f32 %v148, %v151
    %s153 = sld [smem:[#allocation4 + $0x202]]
    %v154 = vstv %s153
    %v155 = vadd.f32 %v152, %v154
    %v156 = vmax.f32 %v119, %v137
    %v157 = vmax.f32 %v156, %v155
    %v158 = vsub.f32 %v119, %v157
    %v159 = vmul.f32 %v158, 1.442695
    %v160 = vpow.pop %v159
    %v161 = vsub.f32 %v137, %v157
    %v162 = vmul.f32 %v161, 1.442695
    %v163 = vpow.pop %v162
    %v164 = vsub.f32 %v155, %v157
    %v165 = vmul.f32 %v164, 1.442695
    %v166 = vpow.pop %v165
    %v167 = vadd.f32 %v160, %v163
    %v168 = vadd.f32 %v167, %v166
    %v169 = vrcp.pop %v168
    %v170 = vmul.f32 %v168, %v169
    %v171 = vsub.f32 2.0, %v170
    %v172 = vmul.f32 %v169, %v171
    %v173 = vlaneseq
    %v174 = vshrl.u32 %v173, 7
    %vm175 = vcmp.eq.s32.totalorder %v174, 0
    %v176 = vmul.f32 %v160, %v172
    %v177 = vlaneseq
    %v178 = vshrl.u32 %v177, 7
    %v179 = vsub.s32 0, %v178
    %v180 = vrot.slane %v176, %v179
    %v181 = vsel %vm175, %v180, 0.0
    %vm182 = vcmp.eq.s32.totalorder %v174, 1
    %v183 = vmul.f32 %v163, %v172
    %v184 = vlaneseq
    %v185 = vshrl.u32 %v184, 7
    %v186 = vsub.s32 0, %v185
    %v187 = vrot.slane %v183, %v186
    %v188 = vsel %vm182, %v187, %v181
    %vm189 = vcmp.eq.s32.totalorder %v174, 2
    %v190 = vmul.f32 %v166, %v172
    %v191 = vlaneseq
    %v192 = vshrl.u32 %v191, 7
    %v193 = vsub.s32 0, %v192
    %v194 = vrot.slane %v190, %v193
    %v195 = vsel %vm189, %v194, %v188
    %196 = vst [vmem:[%s3] sm:$0xff] %v195
    // Predicated region
    $region22: #{simple_model_forward.1} parent=1 // pred_check
      _
    $region23: #{simple_model_forward.1} parent=1 // pred_check_branch
      %198 = sbr.rel (0) target = $region25
    $region24: #{simple_model_forward.1} parent=1 // pred_region
      _
    $region25: #{simple_model_forward.1} parent=1 // pred_fallthru
      _
    // Predicated region
    $region26: #{simple_model_forward.1} parent=1 // pred_check
      _
    $region27: #{simple_model_forward.1} parent=1 // pred_check_branch
      %200 = sbr.rel (0) target = $region29
    $region28: #{simple_model_forward.1} parent=1 // pred_region
      _
    $region29: #{simple_model_forward.1} parent=1 // pred_fallthru
      _
    %201 = vsyncpa [#allocation3], 1
    %202 = vsyncpa [#allocation5], 1

</llo_original>
